<compile_context>
chip_gen: v7x
topology: tpu7x:2x2x1
jax: 0.10.0
libtpu: 0.0.40
codegen_flags: <defaults>
</compile_context>

<pallas_src>
import numpy as np
import jax
import jax.numpy as jnp
from jax.experimental import pallas as pl
from jax.experimental.pallas import tpu as pltpu


# ----------------------------- Pallas kernel ------------------------------ #

def attention_kernel(enc_ref, h_ref, wcomb_ref, wsh_ref, bias_ref, wfull_ref, bfull_ref,
                     awe_ref, alpha_ref):
    enc = enc_ref[...]                                    # (BB, P, E) f32
    h = h_ref[...]                                        # (BB, D)
    BB, P, E = enc.shape
    A = wcomb_ref.shape[1]

    # Encoder path: encoder_att followed by shared_weights, pre-fused into Wcomb so the
    # MXU sees a single (BB*P, E) x (E, A) product (merge of leading dims is layout-free).
    att1 = jnp.dot(enc.reshape(BB * P, E), wcomb_ref[...],
                   preferred_element_type=jnp.float32).reshape(BB, P, A)

    # Decoder path: shared_weights(decoder_hidden). All constant biases
    # (benc@Wsh^T + 2*bsh) were folded into bias_ref, added once on the small 2D tensor.
    hproj = jnp.dot(h, wsh_ref[...], preferred_element_type=jnp.float32) + bias_ref[...]

    att = jnp.maximum(att1 + hproj[:, None, :], 0.0)      # (BB, P, A)

    # full_att (Linear(A, 1)) as a lane reduction -> scores stay lane-dense in P.
    scores = jnp.sum(att * wfull_ref[...][None, :, :], axis=-1) + bfull_ref[...]  # (BB, P)

    # Softmax over the pixel axis (lane axis).
    scores = scores - jnp.max(scores, axis=-1, keepdims=True)
    expv = jnp.exp(scores)
    alpha = expv * pl.reciprocal(jnp.sum(expv, axis=-1, keepdims=True), approx=True)

    # Attention-weighted encoding.
    awe_ref[...] = jnp.sum(enc * alpha[:, :, None], axis=1)    # (BB, E)
    alpha_ref[...] = alpha                                      # (BB, P)


# ----------------------------- Parameters --------------------------------- #

def init_params(key, encoder_dim, decoder_dim, attention_dim):
    E, D, A = encoder_dim, decoder_dim, attention_dim
    ks = jax.random.split(key, 6)

    def u(k, shape, a=0.1):
        return jax.random.uniform(k, shape, jnp.float32, -a, a)

    return {
        'enc_att_w': u(ks[0], (A, E)), 'enc_att_b': u(ks[1], (A,)),
        'shared_w':  u(ks[2], (A, D)), 'shared_b':  u(ks[3], (A,)),
        'full_w':    u(ks[4], (1, A)), 'full_b':    u(ks[5], (1,)),
    }


# ------------------------------- Wrapper ----------------------------------- #

def _round_up(x, m):
    return (x + m - 1) // m * m


def attention_forward(params, encoder_out, decoder_hidden):
    """Pallas implementation of Attention.forward.

    encoder_out:    (B, num_pixels, encoder_dim)
    decoder_hidden: (B, decoder_dim)
    returns: (attention_weighted_encoding (B, E), alpha (B, num_pixels))
    """
    B, P, E = encoder_out.shape
    D = decoder_hidden.shape[1]
    A = params['enc_att_w'].shape[0]
    # shared_weights (Linear(D, A)) is also applied to att1 (last dim A), exactly as in
    # the PyTorch module, which only type-checks when attention_dim == decoder_dim.
    assert A == D, "module requires attention_dim == decoder_dim (shared_weights reuse)"

    # Pad batch to a sublane multiple (8); padded rows are sliced off afterwards.
    B_pad = _round_up(B, 8)
    BB = min(B_pad, 128)                  # batch rows per grid step (fits VMEM easily)
    B_pad = _round_up(B_pad, BB)
    grid = (B_pad // BB,)

    enc = jnp.pad(encoder_out.astype(jnp.float32), ((0, B_pad - B), (0, 0), (0, 0)))
    h = jnp.pad(decoder_hidden.astype(jnp.float32), ((0, B_pad - B), (0, 0)))

    hi = jax.lax.Precision.HIGHEST
    wenc_t = params['enc_att_w'].T                      # (E, A)
    wsh_t = params['shared_w'].T                        # (D, A) == (A, A)
    # Fuse the two sequential linear layers on the encoder path (batch-independent,
    # amortised across forwards): Wcomb = Wenc^T Wsh^T, bias_all = benc Wsh^T + 2 bsh
    # (bsh appears in both att1 and att2).
    wcomb = jnp.dot(wenc_t, wsh_t, precision=hi)                        # (E, A)
    bias_all = (jnp.dot(params['enc_att_b'], wsh_t, precision=hi)
                + 2.0 * params['shared_b'])[None, :]                    # (1, A)
    wfull = params['full_w']                            # (1, A)
    bfull = params['full_b'].reshape(1, 1)              # (1, 1)

    def whole(x):
        n = x.ndim
        return pl.BlockSpec(x.shape, lambda b, n=n: (0,) * n)

    in_specs = [
        pl.BlockSpec((BB, P, E), lambda b: (b, 0, 0)),
        pl.BlockSpec((BB, D), lambda b: (b, 0)),
        whole(wcomb), whole(wsh_t), whole(bias_all), whole(wfull), whole(bfull),
    ]
    out_specs = [
        pl.BlockSpec((BB, E), lambda b: (b, 0)),   # awe, lane-dense in E
        pl.BlockSpec((BB, P), lambda b: (b, 0)),   # alpha, lane-dense in P
    ]
    out_shape = (jax.ShapeDtypeStruct((B_pad, E), jnp.float32),
                 jax.ShapeDtypeStruct((B_pad, P), jnp.float32))

    awe_pad, alpha_pad = pl.pallas_call(
        attention_kernel,
        out_shape=out_shape,
        grid_spec=pltpu.PrefetchScalarGridSpec(
            num_scalar_prefetch=0,
            grid=grid,
            in_specs=in_specs,
            out_specs=out_specs),
        compiler_params=pltpu.CompilerParams(dimension_semantics=("parallel",)),
    )(enc, h, wcomb, wsh_t, bias_all, wfull, bfull)

    return awe_pad[:B], alpha_pad[:B]


# --------------------------- Pure-numpy reference --------------------------- #

def reference_forward(params, encoder_out, decoder_hidden):
    p = {k: np.asarray(v, np.float32) for k, v in params.items()}
    enc = np.asarray(encoder_out, np.float32)
    h = np.asarray(decoder_hidden, np.float32)
    att1 = enc @ p['enc_att_w'].T + p['enc_att_b']
    att1 = att1 @ p['shared_w'].T + p['shared_b']
    att2 = h @ p['shared_w'].T + p['shared_b']
    att = np.maximum(att1 + att2[:, None, :], 0.0) @ p['full_w'].T + p['full_b']
    att = att[..., 0]
    att = att - att.max(1, keepdims=True)
    alpha = np.exp(att)
    alpha /= alpha.sum(1, keepdims=True)
    awe = (enc * alpha[..., None]).sum(1)
    return awe, alpha


# --------------------------------- Main ------------------------------------ #

if __name__ == "__main__":
    encoder_dim = 32
    decoder_dim = 32
    attention_dim = 32           # must equal decoder_dim (shared_weights reuse)
    enc_image_size = 4
    num_pixels = enc_image_size * enc_image_size
    B = 4

    key = jax.random.PRNGKey(0)
    kp, ke, kh = jax.random.split(key, 3)

    params = init_params(kp, encoder_dim, decoder_dim, attention_dim)
    encoder_out = jax.random.normal(ke, (B, num_pixels, encoder_dim), jnp.float32)
    decoder_hidden = jax.random.normal(kh, (B, decoder_dim), jnp.float32)

    awe, alpha = attention_forward(params, encoder_out, decoder_hidden)
    jax.block_until_ready((awe, alpha))

    # Verify against a pure-numpy re-implementation of the PyTorch forward.
    ref_awe, ref_alpha = reference_forward(params, encoder_out, decoder_hidden)
    np.testing.assert_allclose(np.asarray(alpha), ref_alpha, rtol=3e-3, atol=5e-4)
    np.testing.assert_allclose(np.asarray(awe), ref_awe, rtol=3e-3, atol=2e-3)
    assert alpha.shape == (B, num_pixels) and awe.shape == (B, encoder_dim)

    print("KERNEL_OK")
</pallas_src>

<mosaic_0001>
module attributes {stable_mosaic.version = 11 : i64} {
  func.func @attention_kernel(%arg0: i32, %arg1: memref<8x16x32xf32, #tpu.memory_space<vmem>>, %arg2: memref<8x32xf32, #tpu.memory_space<vmem>>, %arg3: memref<32x32xf32, #tpu.memory_space<vmem>>, %arg4: memref<32x32xf32, #tpu.memory_space<vmem>>, %arg5: memref<1x32xf32, #tpu.memory_space<vmem>>, %arg6: memref<1x32xf32, #tpu.memory_space<vmem>>, %arg7: memref<1x1xf32, #tpu.memory_space<vmem>>, %arg8: memref<8x32xf32, #tpu.memory_space<vmem>>, %arg9: memref<8x16xf32, #tpu.memory_space<vmem>>) attributes {dimension_semantics = [#tpu.dimension_semantics<parallel>], iteration_bounds = array<i64: 1>, scalar_prefetch = 0 : i64, scratch_operands = 0 : i64, tpu.core_type = #tpu.core_type<tc>, window_params = [{transform_indices = @transform_0, window_bounds = array<i64: 8, 16, 32>}, {transform_indices = @transform_1, window_bounds = array<i64: 8, 32>}, {pipeline_mode = #tpu.pipeline_mode<synchronous>, transform_indices = @transform_2, window_bounds = array<i64: 32, 32>}, {pipeline_mode = #tpu.pipeline_mode<synchronous>, transform_indices = @transform_3, window_bounds = array<i64: 32, 32>}, {pipeline_mode = #tpu.pipeline_mode<synchronous>, transform_indices = @transform_4, window_bounds = array<i64: 1, 32>}, {pipeline_mode = #tpu.pipeline_mode<synchronous>, transform_indices = @transform_5, window_bounds = array<i64: 1, 32>}, {pipeline_mode = #tpu.pipeline_mode<synchronous>, transform_indices = @transform_6, window_bounds = array<i64: 1, 1>}, {transform_indices = @transform_7, window_bounds = array<i64: 8, 32>}, {transform_indices = @transform_8, window_bounds = array<i64: 8, 16>}]} {
    %c0 = arith.constant 0 : index
    %c0_0 = arith.constant 0 : index
    %c0_1 = arith.constant 0 : index
    %0 = vector.load %arg1[%c0, %c0_0, %c0_1] : memref<8x16x32xf32, #tpu.memory_space<vmem>>, vector<8x16x32xf32>
    %c0_2 = arith.constant 0 : index
    %c0_3 = arith.constant 0 : index
    %1 = vector.load %arg2[%c0_2, %c0_3] : memref<8x32xf32, #tpu.memory_space<vmem>>, vector<8x32xf32>
    %2 = vector.shape_cast %0 : vector<8x16x32xf32> to vector<128x32xf32>
    %c0_4 = arith.constant 0 : index
    %c0_5 = arith.constant 0 : index
    %3 = vector.load %arg3[%c0_4, %c0_5] : memref<32x32xf32, #tpu.memory_space<vmem>>, vector<32x32xf32>
    %cst = arith.constant dense<0.000000e+00> : vector<128x32xf32>
    %4 = tpu.matmul %2, %3, %cst {dimension_numbers = #tpu.dot_dimension_numbers<[1], [0], [0], [1], [0, 0, 1, 1], [], []>} : vector<128x32xf32>, vector<32x32xf32>, vector<128x32xf32> -> vector<128x32xf32>
    %5 = vector.shape_cast %4 : vector<128x32xf32> to vector<8x16x32xf32>
    %c0_6 = arith.constant 0 : index
    %c0_7 = arith.constant 0 : index
    %6 = vector.load %arg4[%c0_6, %c0_7] : memref<32x32xf32, #tpu.memory_space<vmem>>, vector<32x32xf32>
    %cst_8 = arith.constant dense<0.000000e+00> : vector<8x32xf32>
    %7 = tpu.matmul %1, %6, %cst_8 {dimension_numbers = #tpu.dot_dimension_numbers<[1], [0], [0], [1], [0, 0, 1, 1], [], []>} : vector<8x32xf32>, vector<32x32xf32>, vector<8x32xf32> -> vector<8x32xf32>
    %c0_9 = arith.constant 0 : index
    %c0_10 = arith.constant 0 : index
    %8 = vector.load %arg5[%c0_9, %c0_10] : memref<1x32xf32, #tpu.memory_space<vmem>>, vector<1x32xf32>
    %9 = vector.broadcast %8 : vector<1x32xf32> to vector<8x32xf32>
    %10 = arith.addf %7, %9 : vector<8x32xf32>
    %11 = vector.shape_cast %10 : vector<8x32xf32> to vector<8x1x32xf32>
    %12 = vector.broadcast %11 : vector<8x1x32xf32> to vector<8x16x32xf32>
    %13 = arith.addf %5, %12 : vector<8x16x32xf32>
    %cst_11 = arith.constant 0.000000e+00 : f32
    %14 = vector.broadcast %cst_11 : f32 to vector<8x16x32xf32>
    %15 = arith.maximumf %13, %14 : vector<8x16x32xf32>
    %c0_12 = arith.constant 0 : index
    %c0_13 = arith.constant 0 : index
    %16 = vector.load %arg6[%c0_12, %c0_13] : memref<1x32xf32, #tpu.memory_space<vmem>>, vector<1x32xf32>
    %17 = vector.shape_cast %16 : vector<1x32xf32> to vector<1x1x32xf32>
    %18 = vector.broadcast %17 : vector<1x1x32xf32> to vector<8x16x32xf32>
    %19 = arith.mulf %15, %18 : vector<8x16x32xf32>
    %cst_14 = arith.constant dense<0.000000e+00> : vector<8x16xf32>
    %20 = vector.multi_reduction <add>, %19, %cst_14 [2] : vector<8x16x32xf32> to vector<8x16xf32>
    %c0_15 = arith.constant 0 : index
    %c0_16 = arith.constant 0 : index
    %21 = vector.load %arg7[%c0_15, %c0_16] : memref<1x1xf32, #tpu.memory_space<vmem>>, vector<1x1xf32>
    %22 = vector.broadcast %21 : vector<1x1xf32> to vector<8x16xf32>
    %23 = arith.addf %20, %22 : vector<8x16xf32>
    %cst_17 = arith.constant dense<0xFF800000> : vector<8xf32>
    %24 = vector.multi_reduction <maximumf>, %23, %cst_17 [1] : vector<8x16xf32> to vector<8xf32>
    %25 = vector.shape_cast %24 : vector<8xf32> to vector<8x1xf32>
    %26 = vector.broadcast %25 : vector<8x1xf32> to vector<8x16xf32>
    %27 = arith.subf %23, %26 : vector<8x16xf32>
    %28 = math.exp %27 : vector<8x16xf32>
    %cst_18 = arith.constant dense<0.000000e+00> : vector<8xf32>
    %29 = vector.multi_reduction <add>, %28, %cst_18 [1] : vector<8x16xf32> to vector<8xf32>
    %30 = vector.shape_cast %29 : vector<8xf32> to vector<8x1xf32>
    %31 = tpu.reciprocal %30 {approx = true} : vector<8x1xf32> -> vector<8x1xf32>
    %32 = vector.broadcast %31 : vector<8x1xf32> to vector<8x16xf32>
    %33 = arith.mulf %28, %32 : vector<8x16xf32>
    %34 = vector.shape_cast %33 : vector<8x16xf32> to vector<8x16x1xf32>
    %35 = vector.broadcast %34 : vector<8x16x1xf32> to vector<8x16x32xf32>
    %36 = arith.mulf %0, %35 : vector<8x16x32xf32>
    %cst_19 = arith.constant dense<0.000000e+00> : vector<8x32xf32>
    %37 = vector.multi_reduction <add>, %36, %cst_19 [1] : vector<8x16x32xf32> to vector<8x32xf32>
    %c0_20 = arith.constant 0 : index
    %c0_21 = arith.constant 0 : index
    %38 = vector.load %arg8[%c0_20, %c0_21] : memref<8x32xf32, #tpu.memory_space<vmem>>, vector<8x32xf32>
    tpu.vector_store %arg8[%c0_20, %c0_21], %37 {strides = array<i32>} : memref<8x32xf32, #tpu.memory_space<vmem>>, vector<8x32xf32>,
    %c0_22 = arith.constant 0 : index
    %c0_23 = arith.constant 0 : index
    %39 = vector.load %arg9[%c0_22, %c0_23] : memref<8x16xf32, #tpu.memory_space<vmem>>, vector<8x16xf32>
    tpu.vector_store %arg9[%c0_22, %c0_23], %33 {strides = array<i32>} : memref<8x16xf32, #tpu.memory_space<vmem>>, vector<8x16xf32>,
    return
  }
  func.func @transform_0(%arg0: i32) -> (i32, i32, i32) {
    %c0_i32 = arith.constant 0 : i32
    %c0_i32_0 = arith.constant 0 : i32
    %c0_i32_1 = arith.constant 0 : i32
    return %arg0, %c0_i32, %c0_i32_0 : i32, i32, i32
  }
  func.func @transform_1(%arg0: i32) -> (i32, i32) {
    %c0_i32 = arith.constant 0 : i32
    %c0_i32_0 = arith.constant 0 : i32
    return %arg0, %c0_i32 : i32, i32
  }
  func.func @transform_2(%arg0: i32) -> (i32, i32) {
    %c0_i32 = arith.constant 0 : i32
    %c0_i32_0 = arith.constant 0 : i32
    %c0_i32_1 = arith.constant 0 : i32
    return %c0_i32, %c0_i32_0 : i32, i32
  }
  func.func @transform_3(%arg0: i32) -> (i32, i32) {
    %c0_i32 = arith.constant 0 : i32
    %c0_i32_0 = arith.constant 0 : i32
    %c0_i32_1 = arith.constant 0 : i32
    return %c0_i32, %c0_i32_0 : i32, i32
  }
  func.func @transform_4(%arg0: i32) -> (i32, i32) {
    %c0_i32 = arith.constant 0 : i32
    %c0_i32_0 = arith.constant 0 : i32
    %c0_i32_1 = arith.constant 0 : i32
    return %c0_i32, %c0_i32_0 : i32, i32
  }
  func.func @transform_5(%arg0: i32) -> (i32, i32) {
    %c0_i32 = arith.constant 0 : i32
    %c0_i32_0 = arith.constant 0 : i32
    %c0_i32_1 = arith.constant 0 : i32
    return %c0_i32, %c0_i32_0 : i32, i32
  }
  func.func @transform_6(%arg0: i32) -> (i32, i32) {
    %c0_i32 = arith.constant 0 : i32
    %c0_i32_0 = arith.constant 0 : i32
    %c0_i32_1 = arith.constant 0 : i32
    return %c0_i32, %c0_i32_0 : i32, i32
  }
  func.func @transform_7(%arg0: i32) -> (i32, i32) {
    %c0_i32 = arith.constant 0 : i32
    %c0_i32_0 = arith.constant 0 : i32
    return %arg0, %c0_i32 : i32, i32
  }
  func.func @transform_8(%arg0: i32) -> (i32, i32) {
    %c0_i32 = arith.constant 0 : i32
    %c0_i32_0 = arith.constant 0 : i32
    return %arg0, %c0_i32 : i32, i32
  }
}

</mosaic_0001>

<llo_original>
// kernel: tpu_custom_call.1
$region0: #{tpu_custom_call.1}
  #allocation0 [shape = 'u32[]', space=smem, size = 0x4, offset = 0x4, fixed_abs, tag = 'smem constant byte address 0x4 - core index']
  #allocation1 [shape = 'u32[144,128]{1,0:T(1,128)}', space=vmem, size = 0x12000, scoped, tag = 'internal scratch']
  #allocation2 [shape = 'f32[1,1]{1,0:T(1,128)S(1)}', space=vmem, size = 0x200, scoped, tag = 'scoped memory for tpu_custom_call.1']
  %s0 = inlined_call_operand.hbm [shape: f32[8,16,32], index: 0, kind: input, shape index: {}]
  %s1 = inlined_call_operand.hbm [shape: f32[8,32], index: 1, kind: input, shape index: {}]
  %s2 = inlined_call_operand.hbm [shape: f32[32,32], index: 2, kind: input, shape index: {}]
  %s3 = inlined_call_operand.hbm [shape: f32[32,32], index: 3, kind: input, shape index: {}]
  %s4 = inlined_call_operand.vmem [shape: f32[1,32], index: 4, kind: input, shape index: {}]
  %s5 = inlined_call_operand.vmem [shape: f32[1,32], index: 5, kind: input, shape index: {}]
  %s6 = inlined_call_operand.<no memory space> [shape: f32[1,1], index: 6, kind: input, shape index: {}]
  %s7 = inlined_call_operand.hbm [shape: f32[8,32], index: 7, kind: output, shape index: {0}]
  %s8 = inlined_call_operand.hbm [shape: f32[8,16], index: 8, kind: output, shape index: {1}]
  %9 = xla_tuple %s7, %s8
  %s10 = sld [smem:[#allocation0]]
  $region62: #{tpu_custom_call.1} parent=0
    _
  %s12 = ssub.s32 1, %s10
  %s13 = scalar_select 0, %s12, %s10
  %v14 = vstv %s6
  %15 = vst [vmem:[#allocation2] sm:$0x1] %v14
  $region1: #{tpu_custom_call.1} parent=0
    #allocation3 [shape = 'u8[65536]{0}', space=vmem, size = 0x10000, scoped, tag = 'input window, operand 0, single buffered']
    #allocation4 [shape = 's32[1]{0}', space=sflag, size = 0x4, scoped, tag = 'scoped memory for tpu_custom_call.1']
    #allocation5 [shape = 's32[1]{0}', space=sflag, size = 0x4, scoped, tag = 'scoped memory for tpu_custom_call.1']
    #allocation6 [shape = 'u8[4096]{0}', space=vmem, size = 0x1000, scoped, tag = 'input window, operand 1, single buffered']
    #allocation7 [shape = 's32[1]{0}', space=sflag, size = 0x4, scoped, tag = 'scoped memory for tpu_custom_call.1']
    #allocation8 [shape = 'u8[16384]{0}', space=vmem, size = 0x4000, scoped, tag = 'input window, operand 2, single buffered']
    #allocation9 [shape = 'u8[16384]{0}', space=vmem, size = 0x4000, scoped, tag = 'input window, operand 3, single buffered']
    #allocation10 [shape = 's32[1]{0}', space=sflag, size = 0x4, scoped, tag = 'scoped memory for tpu_custom_call.1']
    #allocation11 [shape = 'u8[4096]{0}', space=vmem, size = 0x1000, scoped, tag = 'output window, operand 0, single buffered']
    #allocation12 [shape = 'u8[4096]{0}', space=vmem, size = 0x1000, scoped, tag = 'output window, operand 1, single buffered']
    #allocation13 [shape = 's32[1]{0}', space=sflag, size = 0x4, scoped, tag = 'scoped memory for tpu_custom_call.1']
    %16 = vsyncpa [#allocation4], 0
    %17 = vsyncpa [#allocation7], 0
    %18 = vsyncpa [#allocation10], 0
    %19 = vsyncpa [#allocation5], 0
    %20 = vsyncpa [#allocation13], 0
    // Predicated region
    $region2: #{tpu_custom_call.1} parent=1 // pred_check
      _
    $region3: #{tpu_custom_call.1} parent=1 // pred_check_branch
      %22 = sbr.rel (0) target = $region5
    $region4: #{tpu_custom_call.1} parent=1 // pred_region
      %s24 = ssub.s32 2048, 2048
      %25 = vsyncadd [#allocation4], %s24
      %s26 = sshll.u32 [#allocation3], 4
      %s27 = int_to_ptr.vmem [resolvable:$true] %s26
      %32 = dma.hbm_to_vmem [thread:$0]  %s0, 2048, %s27, [#allocation4], 128, 128, 8
    $region5: #{tpu_custom_call.1} parent=1 // pred_fallthru
      _
    // Predicated region
    $region6: #{tpu_custom_call.1} parent=1 // pred_check
      _
    $region7: #{tpu_custom_call.1} parent=1 // pred_check_branch
      %34 = sbr.rel (0) target = $region9
    $region8: #{tpu_custom_call.1} parent=1 // pred_region
      %s36 = ssub.s32 128, 128
      %37 = vsyncadd [#allocation7], %s36
      %s39 = sshll.u32 [#allocation6], 4
      %s40 = int_to_ptr.vmem [resolvable:$true] %s39
      %42 = dma.hbm_to_vmem [thread:$0]  %s1, 128, %s40, [#allocation7]
    $region9: #{tpu_custom_call.1} parent=1 // pred_fallthru
      _
    // Predicated region
    $region10: #{tpu_custom_call.1} parent=1 // pred_check
      _
    $region11: #{tpu_custom_call.1} parent=1 // pred_check_branch
      %44 = sbr.rel (0) target = $region13
    $region12: #{tpu_custom_call.1} parent=1 // pred_region
      %s46 = ssub.s32 512, 512
      %47 = vsyncadd [#allocation7], %s46
      %s48 = sshll.u32 [#allocation8], 4
      %s49 = int_to_ptr.vmem [resolvable:$true] %s48
      %54 = dma.hbm_to_vmem [thread:$0]  %s2, 512, %s49, [#allocation7], 128, 128, 8
    $region13: #{tpu_custom_call.1} parent=1 // pred_fallthru
      _
    // Predicated region
    $region14: #{tpu_custom_call.1} parent=1 // pred_check
      _
    $region15: #{tpu_custom_call.1} parent=1 // pred_check_branch
      %56 = sbr.rel (0) target = $region17
    $region16: #{tpu_custom_call.1} parent=1 // pred_region
      %s58 = ssub.s32 512, 512
      %59 = vsyncadd [#allocation10], %s58
      %s60 = sshll.u32 [#allocation9], 4
      %s61 = int_to_ptr.vmem [resolvable:$true] %s60
      %66 = dma.hbm_to_vmem [thread:$0]  %s3, 512, %s61, [#allocation10], 128, 128, 8
    $region17: #{tpu_custom_call.1} parent=1 // pred_fallthru
      _
    // Predicated region
    $region18: #{tpu_custom_call.1} parent=1 // pred_check
      _
    $region19: #{tpu_custom_call.1} parent=1 // pred_check_branch
      %68 = sbr.rel (0) target = $region21
    $region20: #{tpu_custom_call.1} parent=1 // pred_region
      _
    $region21: #{tpu_custom_call.1} parent=1 // pred_fallthru
      _
    // Predicated region
    $region22: #{tpu_custom_call.1} parent=1 // pred_check
      _
    $region23: #{tpu_custom_call.1} parent=1 // pred_check_branch
      %70 = sbr.rel (0) target = $region25
    $region24: #{tpu_custom_call.1} parent=1 // pred_region
      _
    $region25: #{tpu_custom_call.1} parent=1 // pred_fallthru
      _
    // Predicated region
    $region26: #{tpu_custom_call.1} parent=1 // pred_check
      _
    $region27: #{tpu_custom_call.1} parent=1 // pred_check_branch
      %72 = sbr.rel (0) target = $region29
    $region28: #{tpu_custom_call.1} parent=1 // pred_region
      _
    $region29: #{tpu_custom_call.1} parent=1 // pred_fallthru
      _
    // Predicated region
    $region30: #{tpu_custom_call.1} parent=1 // pred_check
      _
    $region31: #{tpu_custom_call.1} parent=1 // pred_check_branch
      %74 = sbr.rel (0) target = $region33
    $region32: #{tpu_custom_call.1} parent=1 // pred_region
      %75 = dma.done [#allocation4], 2048
    $region33: #{tpu_custom_call.1} parent=1 // pred_fallthru
      _
    // Predicated region
    $region34: #{tpu_custom_call.1} parent=1 // pred_check
      _
    $region35: #{tpu_custom_call.1} parent=1 // pred_check_branch
      %77 = sbr.rel (0) target = $region37
    $region36: #{tpu_custom_call.1} parent=1 // pred_region
      %78 = dma.done [#allocation7], 128
    $region37: #{tpu_custom_call.1} parent=1 // pred_fallthru
      _
    // Predicated region
    $region38: #{tpu_custom_call.1} parent=1 // pred_check
      _
    $region39: #{tpu_custom_call.1} parent=1 // pred_check_branch
      %80 = sbr.rel (0) target = $region41
    $region40: #{tpu_custom_call.1} parent=1 // pred_region
      %81 = dma.done [#allocation7], 512
    $region41: #{tpu_custom_call.1} parent=1 // pred_fallthru
      _
    // Predicated region
    $region42: #{tpu_custom_call.1} parent=1 // pred_check
      _
    $region43: #{tpu_custom_call.1} parent=1 // pred_check_branch
      %83 = sbr.rel (0) target = $region45
    $region44: #{tpu_custom_call.1} parent=1 // pred_region
      %84 = dma.done [#allocation10], 512
    $region45: #{tpu_custom_call.1} parent=1 // pred_fallthru
      _
    %v85 = vld [vmem:[#allocation3] sm:$0xff]
    %v86 = vld [vmem:[#allocation3 + $0x8] sm:$0xff]
    %v87 = vld [vmem:[#allocation3 + $0x10] sm:$0xff]
    %v88 = vld [vmem:[#allocation3 + $0x18] sm:$0xff]
    %v89 = vld [vmem:[#allocation3 + $0x20] sm:$0xff]
    %v90 = vld [vmem:[#allocation3 + $0x28] sm:$0xff]
    %v91 = vld [vmem:[#allocation3 + $0x30] sm:$0xff]
    %v92 = vld [vmem:[#allocation3 + $0x38] sm:$0xff]
    %v93 = vld [vmem:[#allocation3 + $0x40] sm:$0xff]
    %v94 = vld [vmem:[#allocation3 + $0x48] sm:$0xff]
    %v95 = vld [vmem:[#allocation3 + $0x50] sm:$0xff]
    %v96 = vld [vmem:[#allocation3 + $0x58] sm:$0xff]
    %v97 = vld [vmem:[#allocation3 + $0x60] sm:$0xff]
    %v98 = vld [vmem:[#allocation3 + $0x68] sm:$0xff]
    %v99 = vld [vmem:[#allocation3 + $0x70] sm:$0xff]
    %v100 = vld [vmem:[#allocation3 + $0x78] sm:$0xff]
    %v101 = vld [vmem:[#allocation6] sm:$0xff]
    %v102 = vld [vmem:[#allocation8] sm:$0xff]
    %v103 = vld [vmem:[#allocation8 + $0x8] sm:$0xff]
    %v104 = vld [vmem:[#allocation8 + $0x10] sm:$0xff]
    %v105 = vld [vmem:[#allocation8 + $0x18] sm:$0xff]
    %vm106 = vcmask 261120
    %v108 = vsel %vm106, %v85, 0
    %v111 = vsel %vm106, %v86, 0
    %v114 = vsel %vm106, %v87, 0
    %v117 = vsel %vm106, %v88, 0
    %v120 = vsel %vm106, %v89, 0
    %v123 = vsel %vm106, %v90, 0
    %v126 = vsel %vm106, %v91, 0
    %v129 = vsel %vm106, %v92, 0
    %v132 = vsel %vm106, %v93, 0
    %v135 = vsel %vm106, %v94, 0
    %v138 = vsel %vm106, %v95, 0
    %v141 = vsel %vm106, %v96, 0
    %v144 = vsel %vm106, %v97, 0
    %v147 = vsel %vm106, %v98, 0
    %v150 = vsel %vm106, %v99, 0
    %v153 = vsel %vm106, %v100, 0
    %155 = vmatprep.subr.mxu0 0.0
    %156 = vmatpush1.msra.mxu0 %v102
    %157 = vmatprep.subr.mxu0 0.0
    %158 = vmatpush1.msra.mxu0 %v103
    %159 = vmatprep.subr.mxu0 0.0
    %160 = vmatpush1.msra.mxu0 %v104
    %161 = vmatprep.subr.mxu0 0.0
    %162 = vmatpush1.msra.mxu0 %v105
    %163 = vmatprep.subr.mxu0 0.0
    %164 = vmatpush1.msra.mxu0 0.0
    %165 = vmatprep.subr.mxu0 0.0
    %166 = vmatpush1.msra.mxu0 0.0
    %167 = vmatprep.subr.mxu0 0.0
    %168 = vmatpush1.msra.mxu0 0.0
    %169 = vmatprep.subr.mxu0 0.0
    %170 = vmatpush1.msra.mxu0 0.0
    %171 = vmatprep.subr.mxu0 0.0
    %172 = vmatpush1.msra.mxu0 0.0
    %173 = vmatprep.subr.mxu0 0.0
    %174 = vmatpush1.msra.mxu0 0.0
    %175 = vmatprep.subr.mxu0 0.0
    %176 = vmatpush1.msra.mxu0 0.0
    %177 = vmatprep.subr.mxu0 0.0
    %178 = vmatpush1.msra.mxu0 0.0
    %179 = vmatprep.subr.mxu0 0.0
    %180 = vmatpush1.msra.mxu0 0.0
    %181 = vmatprep.subr.mxu0 0.0
    %182 = vmatpush1.msra.mxu0 0.0
    %183 = vmatprep.subr.mxu0 0.0
    %184 = vmatpush1.msra.mxu0 0.0
    %185 = vmatprep.subr.mxu0 0.0
    %186 = vmatpush1.msra.mxu0 0.0
    %187 = vmatprep.subr.mxu0 0.0
    %188 = vmatpush1.msra.mxu0 0.0
    %189 = vmatprep.subr.mxu0 0.0
    %190 = vmatpush1.msra.mxu0 0.0
    %191 = vmatprep.subr.mxu0 0.0
    %192 = vmatpush1.msra.mxu0 0.0
    %193 = vmatprep.subr.mxu0 0.0
    %194 = vmatpush1.msra.mxu0 0.0
    %195 = vmatprep.subr.mxu0 0.0
    %196 = vmatpush1.msra.mxu0 0.0
    %197 = vmatprep.subr.mxu0 0.0
    %198 = vmatpush1.msra.mxu0 0.0
    %199 = vmatprep.subr.mxu0 0.0
    %200 = vmatpush1.msra.mxu0 0.0
    %201 = vmatprep.subr.mxu0 0.0
    %202 = vmatpush1.msra.mxu0 0.0
    %203 = vmatprep.subr.mxu0 0.0
    %204 = vmatpush1.msra.mxu0 0.0
    %205 = vmatprep.subr.mxu0 0.0
    %206 = vmatpush1.msra.mxu0 0.0
    %207 = vmatprep.subr.mxu0 0.0
    %208 = vmatpush1.msra.mxu0 0.0
    %209 = vmatprep.subr.mxu0 0.0
    %210 = vmatpush1.msra.mxu0 0.0
    %211 = vmatprep.subr.mxu0 0.0
    %212 = vmatpush1.msra.mxu0 0.0
    %213 = vmatprep.subr.mxu0 0.0
    %214 = vmatpush1.msra.mxu0 0.0
    %215 = vmatprep.subr.mxu0 0.0
    %216 = vmatpush1.msra.mxu0 0.0
    %217 = vmatprep.subr.mxu0 0.0
    %218 = vmatpush1.msra.mxu0 0.0
    %219 = vmatprep.mubr.f32.mxu0 0.0
    %220 = vmatmul.mubr.f32.gmra.mrb[0].mxu0 %v108
    %v221 = vpop.f32.mrb[0].mxu0
    %v222 = vadd.f32 0.0, %v221
    %v223 = vpop.f32.mrb[0].mxu0
    %224 = vmatprep.mubr.f32.mxu0 0.0
    %225 = vmatmul.mubr.f32.gmra.mrb[0].mxu0 %v111
    %v226 = vpop.f32.mrb[0].mxu0
    %v227 = vadd.f32 0.0, %v226
    %v228 = vpop.f32.mrb[0].mxu0
    %229 = vmatprep.mubr.f32.mxu0 0.0
    %230 = vmatmul.mubr.f32.gmra.mrb[0].mxu0 %v114
    %v231 = vpop.f32.mrb[0].mxu0
    %v232 = vadd.f32 0.0, %v231
    %v233 = vpop.f32.mrb[0].mxu0
    %234 = vmatprep.mubr.f32.mxu0 0.0
    %235 = vmatmul.mubr.f32.gmra.mrb[0].mxu0 %v117
    %v236 = vpop.f32.mrb[0].mxu0
    %v237 = vadd.f32 0.0, %v236
    %v238 = vpop.f32.mrb[0].mxu0
    %239 = vmatprep.mubr.f32.mxu0 0.0
    %240 = vmatmul.mubr.f32.gmra.mrb[0].mxu0 %v120
    %v241 = vpop.f32.mrb[0].mxu0
    %v242 = vadd.f32 0.0, %v241
    %v243 = vpop.f32.mrb[0].mxu0
    %244 = vmatprep.mubr.f32.mxu0 0.0
    %245 = vmatmul.mubr.f32.gmra.mrb[0].mxu0 %v123
    %v246 = vpop.f32.mrb[0].mxu0
    %v247 = vadd.f32 0.0, %v246
    %v248 = vpop.f32.mrb[0].mxu0
    %249 = vmatprep.mubr.f32.mxu0 0.0
    %250 = vmatmul.mubr.f32.gmra.mrb[0].mxu0 %v126
    %v251 = vpop.f32.mrb[0].mxu0
    %v252 = vadd.f32 0.0, %v251
    %v253 = vpop.f32.mrb[0].mxu0
    %254 = vmatprep.mubr.f32.mxu0 0.0
    %255 = vmatmul.mubr.f32.gmra.mrb[0].mxu0 %v129
    %v256 = vpop.f32.mrb[0].mxu0
    %v257 = vadd.f32 0.0, %v256
    %v258 = vpop.f32.mrb[0].mxu0
    %259 = vmatprep.mubr.f32.mxu0 0.0
    %260 = vmatmul.mubr.f32.gmra.mrb[0].mxu0 %v132
    %v261 = vpop.f32.mrb[0].mxu0
    %v262 = vadd.f32 0.0, %v261
    %v263 = vpop.f32.mrb[0].mxu0
    %264 = vmatprep.mubr.f32.mxu0 0.0
    %265 = vmatmul.mubr.f32.gmra.mrb[0].mxu0 %v135
    %v266 = vpop.f32.mrb[0].mxu0
    %v267 = vadd.f32 0.0, %v266
    %v268 = vpop.f32.mrb[0].mxu0
    %269 = vmatprep.mubr.f32.mxu0 0.0
    %270 = vmatmul.mubr.f32.gmra.mrb[0].mxu0 %v138
    %v271 = vpop.f32.mrb[0].mxu0
    %v272 = vadd.f32 0.0, %v271
    %v273 = vpop.f32.mrb[0].mxu0
    %274 = vmatprep.mubr.f32.mxu0 0.0
    %275 = vmatmul.mubr.f32.gmra.mrb[0].mxu0 %v141
    %v276 = vpop.f32.mrb[0].mxu0
    %v277 = vadd.f32 0.0, %v276
    %v278 = vpop.f32.mrb[0].mxu0
    %279 = vmatprep.mubr.f32.mxu0 0.0
    %280 = vmatmul.mubr.f32.gmra.mrb[0].mxu0 %v144
    %v281 = vpop.f32.mrb[0].mxu0
    %v282 = vadd.f32 0.0, %v281
    %v283 = vpop.f32.mrb[0].mxu0
    %284 = vmatprep.mubr.f32.mxu0 0.0
    %285 = vmatmul.mubr.f32.gmra.mrb[0].mxu0 %v147
    %v286 = vpop.f32.mrb[0].mxu0
    %v287 = vadd.f32 0.0, %v286
    %v288 = vpop.f32.mrb[0].mxu0
    %289 = vmatprep.mubr.f32.mxu0 0.0
    %290 = vmatmul.mubr.f32.gmra.mrb[0].mxu0 %v150
    %v291 = vpop.f32.mrb[0].mxu0
    %v292 = vadd.f32 0.0, %v291
    %v293 = vpop.f32.mrb[0].mxu0
    %294 = vmatprep.mubr.f32.mxu0 0.0
    %295 = vmatmul.mubr.f32.gmra.mrb[0].mxu0 %v153
    %v296 = vpop.f32.mrb[0].mxu0
    %v297 = vadd.f32 0.0, %v296
    %v298 = vpop.f32.mrb[0].mxu0
    %299 = vdwg.mxu0
    %v300 = vld [vmem:[#allocation9] sm:$0xff]
    %v301 = vld [vmem:[#allocation9 + $0x8] sm:$0xff]
    %v302 = vld [vmem:[#allocation9 + $0x10] sm:$0xff]
    %v303 = vld [vmem:[#allocation9 + $0x18] sm:$0xff]
    %v304 = vld [vmem:[%s4] sm:$0x1]
    %v306 = vlaneseq
    %v307 = vshrl.u32 %v306, 7
    %v308 = vsub.s32 0, %v307
    %v309 = vrot.slane %v304, %v308
    %v312 = vsel %vm106, %v101, 0
    %314 = vmatprep.subr.mxu0 0.0
    %315 = vmatpush1.msra.mxu0 %v300
    %316 = vmatprep.subr.mxu0 0.0
    %317 = vmatpush1.msra.mxu0 %v301
    %318 = vmatprep.subr.mxu0 0.0
    %319 = vmatpush1.msra.mxu0 %v302
    %320 = vmatprep.subr.mxu0 0.0
    %321 = vmatpush1.msra.mxu0 %v303
    %322 = vmatprep.subr.mxu0 0.0
    %323 = vmatpush1.msra.mxu0 0.0
    %324 = vmatprep.subr.mxu0 0.0
    %325 = vmatpush1.msra.mxu0 0.0
    %326 = vmatprep.subr.mxu0 0.0
    %327 = vmatpush1.msra.mxu0 0.0
    %328 = vmatprep.subr.mxu0 0.0
    %329 = vmatpush1.msra.mxu0 0.0
    %330 = vmatprep.subr.mxu0 0.0
    %331 = vmatpush1.msra.mxu0 0.0
    %332 = vmatprep.subr.mxu0 0.0
    %333 = vmatpush1.msra.mxu0 0.0
    %334 = vmatprep.subr.mxu0 0.0
    %335 = vmatpush1.msra.mxu0 0.0
    %336 = vmatprep.subr.mxu0 0.0
    %337 = vmatpush1.msra.mxu0 0.0
    %338 = vmatprep.subr.mxu0 0.0
    %339 = vmatpush1.msra.mxu0 0.0
    %340 = vmatprep.subr.mxu0 0.0
    %341 = vmatpush1.msra.mxu0 0.0
    %342 = vmatprep.subr.mxu0 0.0
    %343 = vmatpush1.msra.mxu0 0.0
    %344 = vmatprep.subr.mxu0 0.0
    %345 = vmatpush1.msra.mxu0 0.0
    %346 = vmatprep.subr.mxu0 0.0
    %347 = vmatpush1.msra.mxu0 0.0
    %348 = vmatprep.subr.mxu0 0.0
    %349 = vmatpush1.msra.mxu0 0.0
    %350 = vmatprep.subr.mxu0 0.0
    %351 = vmatpush1.msra.mxu0 0.0
    %352 = vmatprep.subr.mxu0 0.0
    %353 = vmatpush1.msra.mxu0 0.0
    %354 = vmatprep.subr.mxu0 0.0
    %355 = vmatpush1.msra.mxu0 0.0
    %356 = vmatprep.subr.mxu0 0.0
    %357 = vmatpush1.msra.mxu0 0.0
    %358 = vmatprep.subr.mxu0 0.0
    %359 = vmatpush1.msra.mxu0 0.0
    %360 = vmatprep.subr.mxu0 0.0
    %361 = vmatpush1.msra.mxu0 0.0
    %362 = vmatprep.subr.mxu0 0.0
    %363 = vmatpush1.msra.mxu0 0.0
    %364 = vmatprep.subr.mxu0 0.0
    %365 = vmatpush1.msra.mxu0 0.0
    %366 = vmatprep.subr.mxu0 0.0
    %367 = vmatpush1.msra.mxu0 0.0
    %368 = vmatprep.subr.mxu0 0.0
    %369 = vmatpush1.msra.mxu0 0.0
    %370 = vmatprep.subr.mxu0 0.0
    %371 = vmatpush1.msra.mxu0 0.0
    %372 = vmatprep.subr.mxu0 0.0
    %373 = vmatpush1.msra.mxu0 0.0
    %374 = vmatprep.subr.mxu0 0.0
    %375 = vmatpush1.msra.mxu0 0.0
    %376 = vmatprep.subr.mxu0 0.0
    %377 = vmatpush1.msra.mxu0 0.0
    %378 = vmatprep.mubr.f32.mxu0 0.0
    %379 = vmatmul.mubr.f32.gmra.mrb[0].mxu0 %v312
    %v380 = vpop.f32.mrb[0].mxu0
    %v381 = vadd.f32 %v309, %v380
    %v382 = vpop.f32.mrb[0].mxu0
    %383 = vdwg.mxu0
    %v385 = vcombine.high %v381, %v381
    %v387 = vunpack.c.l.s4 1966171168
    %v388 = vunpack.c.0.s8 %v387
    %v389 = vlaneseq
    %v390 = vshrl.u32 %v389, 7
    %v391 = vsub.s32 %v388, %v390
    %v392 = vrot.slane %v381, %v391
    %v394 = vunpack.c.l.s4 1966171168
    %v395 = vunpack.c.0.s8 %v394
    %v396 = vlaneseq
    %v397 = vshrl.u32 %v396, 7
    %v398 = vsub.s32 %v395, %v397
    %v399 = vrot.slane %v385, %v398
    %v400 = vcombine.high %v392, %v392
    %v401 = vcombine.high %v399, %v399
    %v403 = vunpack.c.l.s4 1966171168
    %v404 = vunpack.c.0.s8 %v403
    %v405 = vlaneseq
    %v406 = vshrl.u32 %v405, 7
    %v407 = vsub.s32 %v404, %v406
    %v408 = vrot.slane %v392, %v407
    %v410 = vunpack.c.l.s4 1966171168
    %v411 = vunpack.c.0.s8 %v410
    %v412 = vlaneseq
    %v413 = vshrl.u32 %v412, 7
    %v414 = vsub.s32 %v411, %v413
    %v415 = vrot.slane %v399, %v414
    %v417 = vunpack.c.l.s4 1966171168
    %v418 = vunpack.c.0.s8 %v417
    %v419 = vlaneseq
    %v420 = vshrl.u32 %v419, 7
    %v421 = vsub.s32 %v418, %v420
    %v422 = vrot.slane %v400, %v421
    %v424 = vunpack.c.l.s4 1966171168
    %v425 = vunpack.c.0.s8 %v424
    %v426 = vlaneseq
    %v427 = vshrl.u32 %v426, 7
    %v428 = vsub.s32 %v425, %v427
    %v429 = vrot.slane %v401, %v428
    %v430 = vcombine.high %v408, %v408
    %v431 = vcombine.high %v415, %v415
    %v432 = vcombine.high %v422, %v422
    %v433 = vcombine.high %v429, %v429
    %v434 = vlaneseq
    %v435 = vshrl.u32 %v434, 7
    %v436 = vsub.s32 0, %v435
    %v437 = vrot.slane %v408, %v436
    %v438 = vlaneseq
    %v439 = vshrl.u32 %v438, 7
    %v440 = vsub.s32 0, %v439
    %v441 = vrot.slane %v422, %v440
    %v442 = vlaneseq
    %v443 = vshrl.u32 %v442, 7
    %v444 = vsub.s32 0, %v443
    %v445 = vrot.slane %v430, %v444
    %v446 = vlaneseq
    %v447 = vshrl.u32 %v446, 7
    %v448 = vsub.s32 0, %v447
    %v449 = vrot.slane %v432, %v448
    %v450 = vlaneseq
    %v451 = vshrl.u32 %v450, 7
    %v452 = vsub.s32 0, %v451
    %v453 = vrot.slane %v415, %v452
    %v454 = vlaneseq
    %v455 = vshrl.u32 %v454, 7
    %v456 = vsub.s32 0, %v455
    %v457 = vrot.slane %v429, %v456
    %v458 = vlaneseq
    %v459 = vshrl.u32 %v458, 7
    %v460 = vsub.s32 0, %v459
    %v461 = vrot.slane %v431, %v460
    %v462 = vlaneseq
    %v463 = vshrl.u32 %v462, 7
    %v464 = vsub.s32 0, %v463
    %v465 = vrot.slane %v433, %v464
    %v474 = vadd.f32 %v222, %v437
    %v475 = vadd.f32 %v227, %v437
    %v476 = vadd.f32 %v232, %v441
    %v477 = vadd.f32 %v237, %v441
    %v478 = vadd.f32 %v242, %v445
    %v479 = vadd.f32 %v247, %v445
    %v480 = vadd.f32 %v252, %v449
    %v481 = vadd.f32 %v257, %v449
    %v482 = vadd.f32 %v262, %v453
    %v483 = vadd.f32 %v267, %v453
    %v484 = vadd.f32 %v272, %v457
    %v485 = vadd.f32 %v277, %v457
    %v486 = vadd.f32 %v282, %v461
    %v487 = vadd.f32 %v287, %v461
    %v488 = vadd.f32 %v292, %v465
    %v489 = vadd.f32 %v297, %v465
    %v490 = vmax.f32 %v474, 0.0
    %v491 = vmax.f32 %v475, 0.0
    %v492 = vmax.f32 %v476, 0.0
    %v493 = vmax.f32 %v477, 0.0
    %v494 = vmax.f32 %v478, 0.0
    %v495 = vmax.f32 %v479, 0.0
    %v496 = vmax.f32 %v480, 0.0
    %v497 = vmax.f32 %v481, 0.0
    %v498 = vmax.f32 %v482, 0.0
    %v499 = vmax.f32 %v483, 0.0
    %v500 = vmax.f32 %v484, 0.0
    %v501 = vmax.f32 %v485, 0.0
    %v502 = vmax.f32 %v486, 0.0
    %v503 = vmax.f32 %v487, 0.0
    %v504 = vmax.f32 %v488, 0.0
    %v505 = vmax.f32 %v489, 0.0
    %v506 = vld [vmem:[%s5] sm:$0x1]
    %v508 = vlaneseq
    %v509 = vshrl.u32 %v508, 7
    %v510 = vsub.s32 0, %v509
    %v511 = vrot.slane %v506, %v510
    %v513 = vmul.f32 %v490, %v511
    %v514 = vmul.f32 %v491, %v511
    %v515 = vmul.f32 %v492, %v511
    %v516 = vmul.f32 %v493, %v511
    %v517 = vmul.f32 %v494, %v511
    %v518 = vmul.f32 %v495, %v511
    %v519 = vmul.f32 %v496, %v511
    %v520 = vmul.f32 %v497, %v511
    %v521 = vmul.f32 %v498, %v511
    %v522 = vmul.f32 %v499, %v511
    %v523 = vmul.f32 %v500, %v511
    %v524 = vmul.f32 %v501, %v511
    %v525 = vmul.f32 %v502, %v511
    %v526 = vmul.f32 %v503, %v511
    %v527 = vmul.f32 %v504, %v511
    %v528 = vmul.f32 %v505, %v511
    %v529 = vsel %vm106, %v513, 0.0
    %530 = vadd.xlane.f32.xlu0 %v529
    %v531 = vpop.xlane.xlu0 %530
    %v532 = vsel %vm106, %v514, 0.0
    %533 = vadd.xlane.f32.xlu0 %v532
    %v534 = vpop.xlane.xlu0 %533
    %v535 = vsel %vm106, %v515, 0.0
    %536 = vadd.xlane.f32.xlu0 %v535
    %v537 = vpop.xlane.xlu0 %536
    %v538 = vsel %vm106, %v516, 0.0
    %539 = vadd.xlane.f32.xlu0 %v538
    %v540 = vpop.xlane.xlu0 %539
    %v541 = vsel %vm106, %v517, 0.0
    %542 = vadd.xlane.f32.xlu0 %v541
    %v543 = vpop.xlane.xlu0 %542
    %v544 = vsel %vm106, %v518, 0.0
    %545 = vadd.xlane.f32.xlu0 %v544
    %v546 = vpop.xlane.xlu0 %545
    %v547 = vsel %vm106, %v519, 0.0
    %548 = vadd.xlane.f32.xlu0 %v547
    %v549 = vpop.xlane.xlu0 %548
    %v550 = vsel %vm106, %v520, 0.0
    %551 = vadd.xlane.f32.xlu0 %v550
    %v552 = vpop.xlane.xlu0 %551
    %v553 = vsel %vm106, %v521, 0.0
    %554 = vadd.xlane.f32.xlu0 %v553
    %v555 = vpop.xlane.xlu0 %554
    %v556 = vsel %vm106, %v522, 0.0
    %557 = vadd.xlane.f32.xlu0 %v556
    %v558 = vpop.xlane.xlu0 %557
    %v559 = vsel %vm106, %v523, 0.0
    %560 = vadd.xlane.f32.xlu0 %v559
    %v561 = vpop.xlane.xlu0 %560
    %v562 = vsel %vm106, %v524, 0.0
    %563 = vadd.xlane.f32.xlu0 %v562
    %v564 = vpop.xlane.xlu0 %563
    %v565 = vsel %vm106, %v525, 0.0
    %566 = vadd.xlane.f32.xlu0 %v565
    %v567 = vpop.xlane.xlu0 %566
    %v568 = vsel %vm106, %v526, 0.0
    %569 = vadd.xlane.f32.xlu0 %v568
    %v570 = vpop.xlane.xlu0 %569
    %v571 = vsel %vm106, %v527, 0.0
    %572 = vadd.xlane.f32.xlu0 %v571
    %v573 = vpop.xlane.xlu0 %572
    %v574 = vsel %vm106, %v528, 0.0
    %575 = vadd.xlane.f32.xlu0 %v574
    %v576 = vpop.xlane.xlu0 %575
    %v577 = vld [vmem:[#allocation2] sm:$0x1]
    %v579 = vlaneseq
    %v580 = vshrl.u32 %v579, 7
    %v581 = vsub.s32 0, %v580
    %v582 = vrot.slane %v577, %v581
    %583 = vset.pattern.permute.xlu0 0
    %584 = vperm.xlu0 %583, %v582
    %v585 = vpop.permute.xlu0 %584
    %v587 = vadd.f32 %v531, %v585
    %v588 = vadd.f32 %v534, %v585
    %v589 = vadd.f32 %v537, %v585
    %v590 = vadd.f32 %v540, %v585
    %v591 = vadd.f32 %v543, %v585
    %v592 = vadd.f32 %v546, %v585
    %v593 = vadd.f32 %v549, %v585
    %v594 = vadd.f32 %v552, %v585
    %v595 = vadd.f32 %v555, %v585
    %v596 = vadd.f32 %v558, %v585
    %v597 = vadd.f32 %v561, %v585
    %v598 = vadd.f32 %v564, %v585
    %v599 = vadd.f32 %v567, %v585
    %v600 = vadd.f32 %v570, %v585
    %v601 = vadd.f32 %v573, %v585
    %v602 = vadd.f32 %v576, %v585
    %v619 = vlaneseq
    %v620 = vand.u32 %v619, 127
    %v621 = vlaneseq
    %v622 = vshrl.u32 %v621, 7
    %v623 = vsub.s32 %v620, %v622
    %v624 = vrot.slane %v587, %v623
    %v625 = vadd.s32 %v620, 4294967288
    %v626 = vlaneseq
    %v627 = vshrl.u32 %v626, 7
    %v628 = vsub.s32 %v625, %v627
    %v629 = vrot.slane %v588, %v628
    %vm630 = vcmask 130112
    %v631 = vsel %vm630, %v629, %v624
    %v632 = vlaneseq
    %v633 = vshrl.u32 %v632, 7
    %v634 = vsub.s32 %v620, %v633
    %v635 = vrot.slane %v589, %v634
    %v636 = vlaneseq
    %v637 = vshrl.u32 %v636, 7
    %v638 = vsub.s32 %v625, %v637
    %v639 = vrot.slane %v590, %v638
    %v640 = vsel %vm630, %v639, %v635
    %v641 = vlaneseq
    %v642 = vshrl.u32 %v641, 7
    %v643 = vsub.s32 %v620, %v642
    %v644 = vrot.slane %v591, %v643
    %v645 = vlaneseq
    %v646 = vshrl.u32 %v645, 7
    %v647 = vsub.s32 %v625, %v646
    %v648 = vrot.slane %v592, %v647
    %v649 = vsel %vm630, %v648, %v644
    %v650 = vlaneseq
    %v651 = vshrl.u32 %v650, 7
    %v652 = vsub.s32 %v620, %v651
    %v653 = vrot.slane %v593, %v652
    %v654 = vlaneseq
    %v655 = vshrl.u32 %v654, 7
    %v656 = vsub.s32 %v625, %v655
    %v657 = vrot.slane %v594, %v656
    %v658 = vsel %vm630, %v657, %v653
    %v659 = vlaneseq
    %v660 = vshrl.u32 %v659, 7
    %v661 = vsub.s32 %v620, %v660
    %v662 = vrot.slane %v595, %v661
    %v663 = vlaneseq
    %v664 = vshrl.u32 %v663, 7
    %v665 = vsub.s32 %v625, %v664
    %v666 = vrot.slane %v596, %v665
    %v667 = vsel %vm630, %v666, %v662
    %v668 = vlaneseq
    %v669 = vshrl.u32 %v668, 7
    %v670 = vsub.s32 %v620, %v669
    %v671 = vrot.slane %v597, %v670
    %v672 = vlaneseq
    %v673 = vshrl.u32 %v672, 7
    %v674 = vsub.s32 %v625, %v673
    %v675 = vrot.slane %v598, %v674
    %v676 = vsel %vm630, %v675, %v671
    %v677 = vlaneseq
    %v678 = vshrl.u32 %v677, 7
    %v679 = vsub.s32 %v620, %v678
    %v680 = vrot.slane %v599, %v679
    %v681 = vlaneseq
    %v682 = vshrl.u32 %v681, 7
    %v683 = vsub.s32 %v625, %v682
    %v684 = vrot.slane %v600, %v683
    %v685 = vsel %vm630, %v684, %v680
    %v686 = vlaneseq
    %v687 = vshrl.u32 %v686, 7
    %v688 = vsub.s32 %v620, %v687
    %v689 = vrot.slane %v601, %v688
    %v690 = vlaneseq
    %v691 = vshrl.u32 %v690, 7
    %v692 = vsub.s32 %v625, %v691
    %v693 = vrot.slane %v602, %v692
    %v694 = vsel %vm630, %v693, %v689
    %vm695 = vcmask 1041409
    %v696 = vsel %vm695, %v640, %v631
    %vm697 = vcmask 1042434
    %v698 = vsel %vm697, %v649, %v696
    %vm699 = vcmask 1043459
    %v700 = vsel %vm699, %v658, %v698
    %vm701 = vcmask 1044484
    %v702 = vsel %vm701, %v667, %v700
    %vm703 = vcmask 1045509
    %v704 = vsel %vm703, %v676, %v702
    %vm705 = vcmask 1046534
    %v706 = vsel %vm705, %v685, %v704
    %vm707 = vcmask 1047559
    %v708 = vsel %vm707, %v694, %v706
    %vm710 = vcmask 130048
    %v711 = vsel %vm710, %v708, -inf
    %712 = vmax.xlane.f32.xlu0 %v711
    %v713 = vpop.xlane.xlu0 %712
    %v715 = vlaneseq
    %v716 = vshrl.u32 %v715, 7
    %v717 = vsub.s32 0, %v716
    %v718 = vrot.slane %v713, %v717
    %v719 = vlaneseq
    %v720 = vshrl.u32 %v719, 7
    %v721 = vsub.s32 1, %v720
    %v722 = vrot.slane %v713, %v721
    %v723 = vlaneseq
    %v724 = vshrl.u32 %v723, 7
    %v725 = vsub.s32 2, %v724
    %v726 = vrot.slane %v713, %v725
    %v727 = vlaneseq
    %v728 = vshrl.u32 %v727, 7
    %v729 = vsub.s32 3, %v728
    %v730 = vrot.slane %v713, %v729
    %v731 = vlaneseq
    %v732 = vshrl.u32 %v731, 7
    %v733 = vsub.s32 4, %v732
    %v734 = vrot.slane %v713, %v733
    %v735 = vlaneseq
    %v736 = vshrl.u32 %v735, 7
    %v737 = vsub.s32 5, %v736
    %v738 = vrot.slane %v713, %v737
    %v739 = vlaneseq
    %v740 = vshrl.u32 %v739, 7
    %v741 = vsub.s32 6, %v740
    %v742 = vrot.slane %v713, %v741
    %v743 = vlaneseq
    %v744 = vshrl.u32 %v743, 7
    %v745 = vsub.s32 7, %v744
    %v746 = vrot.slane %v713, %v745
    %v755 = vsub.f32 %v587, %v718
    %v756 = vsub.f32 %v588, %v718
    %v757 = vsub.f32 %v589, %v722
    %v758 = vsub.f32 %v590, %v722
    %v759 = vsub.f32 %v591, %v726
    %v760 = vsub.f32 %v592, %v726
    %v761 = vsub.f32 %v593, %v730
    %v762 = vsub.f32 %v594, %v730
    %v763 = vsub.f32 %v595, %v734
    %v764 = vsub.f32 %v596, %v734
    %v765 = vsub.f32 %v597, %v738
    %v766 = vsub.f32 %v598, %v738
    %v767 = vsub.f32 %v599, %v742
    %v768 = vsub.f32 %v600, %v742
    %v769 = vsub.f32 %v601, %v746
    %v770 = vsub.f32 %v602, %v746
    %v771 = vmul.f32 %v755, 1.442695
    %v772 = vpow.pop %v771
    %v773 = vmul.f32 %v756, 1.442695
    %v774 = vpow.pop %v773
    %v775 = vmul.f32 %v757, 1.442695
    %v776 = vpow.pop %v775
    %v777 = vmul.f32 %v758, 1.442695
    %v778 = vpow.pop %v777
    %v779 = vmul.f32 %v759, 1.442695
    %v780 = vpow.pop %v779
    %v781 = vmul.f32 %v760, 1.442695
    %v782 = vpow.pop %v781
    %v783 = vmul.f32 %v761, 1.442695
    %v784 = vpow.pop %v783
    %v785 = vmul.f32 %v762, 1.442695
    %v786 = vpow.pop %v785
    %v787 = vmul.f32 %v763, 1.442695
    %v788 = vpow.pop %v787
    %v789 = vmul.f32 %v764, 1.442695
    %v790 = vpow.pop %v789
    %v791 = vmul.f32 %v765, 1.442695
    %v792 = vpow.pop %v791
    %v793 = vmul.f32 %v766, 1.442695
    %v794 = vpow.pop %v793
    %v795 = vmul.f32 %v767, 1.442695
    %v796 = vpow.pop %v795
    %v797 = vmul.f32 %v768, 1.442695
    %v798 = vpow.pop %v797
    %v799 = vmul.f32 %v769, 1.442695
    %v800 = vpow.pop %v799
    %v801 = vmul.f32 %v770, 1.442695
    %v802 = vpow.pop %v801
    %819 = vset.pattern.permute.xlu0 0
    %820 = vperm.xlu0 %819, %v772
    %v821 = vpop.permute.xlu0 %820
    %822 = vset.pattern.permute.xlu0 0
    %823 = vperm.xlu0 %822, %v774
    %v824 = vpop.permute.xlu0 %823
    %825 = vset.pattern.permute.xlu0 0
    %826 = vperm.xlu0 %825, %v776
    %v827 = vpop.permute.xlu0 %826
    %828 = vset.pattern.permute.xlu0 0
    %829 = vperm.xlu0 %828, %v778
    %v830 = vpop.permute.xlu0 %829
    %831 = vset.pattern.permute.xlu0 0
    %832 = vperm.xlu0 %831, %v780
    %v833 = vpop.permute.xlu0 %832
    %834 = vset.pattern.permute.xlu0 0
    %835 = vperm.xlu0 %834, %v782
    %v836 = vpop.permute.xlu0 %835
    %837 = vset.pattern.permute.xlu0 0
    %838 = vperm.xlu0 %837, %v784
    %v839 = vpop.permute.xlu0 %838
    %840 = vset.pattern.permute.xlu0 0
    %841 = vperm.xlu0 %840, %v786
    %v842 = vpop.permute.xlu0 %841
    %843 = vset.pattern.permute.xlu0 0
    %844 = vperm.xlu0 %843, %v788
    %v845 = vpop.permute.xlu0 %844
    %846 = vset.pattern.permute.xlu0 0
    %847 = vperm.xlu0 %846, %v790
    %v848 = vpop.permute.xlu0 %847
    %849 = vset.pattern.permute.xlu0 0
    %850 = vperm.xlu0 %849, %v792
    %v851 = vpop.permute.xlu0 %850
    %852 = vset.pattern.permute.xlu0 0
    %853 = vperm.xlu0 %852, %v794
    %v854 = vpop.permute.xlu0 %853
    %855 = vset.pattern.permute.xlu0 0
    %856 = vperm.xlu0 %855, %v796
    %v857 = vpop.permute.xlu0 %856
    %858 = vset.pattern.permute.xlu0 0
    %859 = vperm.xlu0 %858, %v798
    %v860 = vpop.permute.xlu0 %859
    %861 = vset.pattern.permute.xlu0 0
    %862 = vperm.xlu0 %861, %v800
    %v863 = vpop.permute.xlu0 %862
    %864 = vset.pattern.permute.xlu0 0
    %865 = vperm.xlu0 %864, %v802
    %v866 = vpop.permute.xlu0 %865
    %v867 = vlaneseq
    %v868 = vshrl.u32 %v867, 7
    %v869 = vsub.s32 %v620, %v868
    %v870 = vrot.slane %v821, %v869
    %v871 = vlaneseq
    %v872 = vshrl.u32 %v871, 7
    %v873 = vsub.s32 %v625, %v872
    %v874 = vrot.slane %v824, %v873
    %v875 = vsel %vm630, %v874, %v870
    %v876 = vlaneseq
    %v877 = vshrl.u32 %v876, 7
    %v878 = vsub.s32 %v620, %v877
    %v879 = vrot.slane %v827, %v878
    %v880 = vlaneseq
    %v881 = vshrl.u32 %v880, 7
    %v882 = vsub.s32 %v625, %v881
    %v883 = vrot.slane %v830, %v882
    %v884 = vsel %vm630, %v883, %v879
    %v885 = vlaneseq
    %v886 = vshrl.u32 %v885, 7
    %v887 = vsub.s32 %v620, %v886
    %v888 = vrot.slane %v833, %v887
    %v889 = vlaneseq
    %v890 = vshrl.u32 %v889, 7
    %v891 = vsub.s32 %v625, %v890
    %v892 = vrot.slane %v836, %v891
    %v893 = vsel %vm630, %v892, %v888
    %v894 = vlaneseq
    %v895 = vshrl.u32 %v894, 7
    %v896 = vsub.s32 %v620, %v895
    %v897 = vrot.slane %v839, %v896
    %v898 = vlaneseq
    %v899 = vshrl.u32 %v898, 7
    %v900 = vsub.s32 %v625, %v899
    %v901 = vrot.slane %v842, %v900
    %v902 = vsel %vm630, %v901, %v897
    %v903 = vlaneseq
    %v904 = vshrl.u32 %v903, 7
    %v905 = vsub.s32 %v620, %v904
    %v906 = vrot.slane %v845, %v905
    %v907 = vlaneseq
    %v908 = vshrl.u32 %v907, 7
    %v909 = vsub.s32 %v625, %v908
    %v910 = vrot.slane %v848, %v909
    %v911 = vsel %vm630, %v910, %v906
    %v912 = vlaneseq
    %v913 = vshrl.u32 %v912, 7
    %v914 = vsub.s32 %v620, %v913
    %v915 = vrot.slane %v851, %v914
    %v916 = vlaneseq
    %v917 = vshrl.u32 %v916, 7
    %v918 = vsub.s32 %v625, %v917
    %v919 = vrot.slane %v854, %v918
    %v920 = vsel %vm630, %v919, %v915
    %v921 = vlaneseq
    %v922 = vshrl.u32 %v921, 7
    %v923 = vsub.s32 %v620, %v922
    %v924 = vrot.slane %v857, %v923
    %v925 = vlaneseq
    %v926 = vshrl.u32 %v925, 7
    %v927 = vsub.s32 %v625, %v926
    %v928 = vrot.slane %v860, %v927
    %v929 = vsel %vm630, %v928, %v924
    %v930 = vlaneseq
    %v931 = vshrl.u32 %v930, 7
    %v932 = vsub.s32 %v620, %v931
    %v933 = vrot.slane %v863, %v932
    %v934 = vlaneseq
    %v935 = vshrl.u32 %v934, 7
    %v936 = vsub.s32 %v625, %v935
    %v937 = vrot.slane %v866, %v936
    %v938 = vsel %vm630, %v937, %v933
    %v939 = vsel %vm695, %v884, %v875
    %v940 = vsel %vm697, %v893, %v939
    %v941 = vsel %vm699, %v902, %v940
    %v942 = vsel %vm701, %v911, %v941
    %v943 = vsel %vm703, %v920, %v942
    %v944 = vsel %vm705, %v929, %v943
    %v945 = vsel %vm707, %v938, %v944
    %v947 = vsel %vm710, %v945, 0.0
    %948 = vadd.xlane.f32.xlu0 %v947
    %v949 = vpop.xlane.xlu0 %948
    %v950 = vrcp.pop %v949
    %v952 = vlaneseq
    %v953 = vshrl.u32 %v952, 7
    %v954 = vsub.s32 0, %v953
    %v955 = vrot.slane %v950, %v954
    %v956 = vlaneseq
    %v957 = vshrl.u32 %v956, 7
    %v958 = vsub.s32 1, %v957
    %v959 = vrot.slane %v950, %v958
    %v960 = vlaneseq
    %v961 = vshrl.u32 %v960, 7
    %v962 = vsub.s32 2, %v961
    %v963 = vrot.slane %v950, %v962
    %v964 = vlaneseq
    %v965 = vshrl.u32 %v964, 7
    %v966 = vsub.s32 3, %v965
    %v967 = vrot.slane %v950, %v966
    %v968 = vlaneseq
    %v969 = vshrl.u32 %v968, 7
    %v970 = vsub.s32 4, %v969
    %v971 = vrot.slane %v950, %v970
    %v972 = vlaneseq
    %v973 = vshrl.u32 %v972, 7
    %v974 = vsub.s32 5, %v973
    %v975 = vrot.slane %v950, %v974
    %v976 = vlaneseq
    %v977 = vshrl.u32 %v976, 7
    %v978 = vsub.s32 6, %v977
    %v979 = vrot.slane %v950, %v978
    %v980 = vlaneseq
    %v981 = vshrl.u32 %v980, 7
    %v982 = vsub.s32 7, %v981
    %v983 = vrot.slane %v950, %v982
    %v992 = vmul.f32 %v772, %v955
    %v993 = vmul.f32 %v774, %v955
    %v994 = vmul.f32 %v776, %v959
    %v995 = vmul.f32 %v778, %v959
    %v996 = vmul.f32 %v780, %v963
    %v997 = vmul.f32 %v782, %v963
    %v998 = vmul.f32 %v784, %v967
    %v999 = vmul.f32 %v786, %v967
    %v1000 = vmul.f32 %v788, %v971
    %v1001 = vmul.f32 %v790, %v971
    %v1002 = vmul.f32 %v792, %v975
    %v1003 = vmul.f32 %v794, %v975
    %v1004 = vmul.f32 %v796, %v979
    %v1005 = vmul.f32 %v798, %v979
    %v1006 = vmul.f32 %v800, %v983
    %v1007 = vmul.f32 %v802, %v983
    %1009 = vset.pattern.permute.xlu0 0
    %1010 = vperm.xlu0 %1009, %v992
    %v1011 = vpop.permute.xlu0 %1010
    %1014 = vset.pattern.permute.xlu0 0
    %1015 = vperm.xlu0 %1014, %v993
    %v1016 = vpop.permute.xlu0 %1015
    %1019 = vset.pattern.permute.xlu0 0
    %1020 = vperm.xlu0 %1019, %v994
    %v1021 = vpop.permute.xlu0 %1020
    %1024 = vset.pattern.permute.xlu0 0
    %1025 = vperm.xlu0 %1024, %v995
    %v1026 = vpop.permute.xlu0 %1025
    %1029 = vset.pattern.permute.xlu0 0
    %1030 = vperm.xlu0 %1029, %v996
    %v1031 = vpop.permute.xlu0 %1030
    %1034 = vset.pattern.permute.xlu0 0
    %1035 = vperm.xlu0 %1034, %v997
    %v1036 = vpop.permute.xlu0 %1035
    %1039 = vset.pattern.permute.xlu0 0
    %1040 = vperm.xlu0 %1039, %v998
    %v1041 = vpop.permute.xlu0 %1040
    %1044 = vset.pattern.permute.xlu0 0
    %1045 = vperm.xlu0 %1044, %v999
    %v1046 = vpop.permute.xlu0 %1045
    %1049 = vset.pattern.permute.xlu0 0
    %1050 = vperm.xlu0 %1049, %v1000
    %v1051 = vpop.permute.xlu0 %1050
    %1054 = vset.pattern.permute.xlu0 0
    %1055 = vperm.xlu0 %1054, %v1001
    %v1056 = vpop.permute.xlu0 %1055
    %1059 = vset.pattern.permute.xlu0 0
    %1060 = vperm.xlu0 %1059, %v1002
    %v1061 = vpop.permute.xlu0 %1060
    %1064 = vset.pattern.permute.xlu0 0
    %1065 = vperm.xlu0 %1064, %v1003
    %v1066 = vpop.permute.xlu0 %1065
    %1069 = vset.pattern.permute.xlu0 0
    %1070 = vperm.xlu0 %1069, %v1004
    %v1071 = vpop.permute.xlu0 %1070
    %1074 = vset.pattern.permute.xlu0 0
    %1075 = vperm.xlu0 %1074, %v1005
    %v1076 = vpop.permute.xlu0 %1075
    %1079 = vset.pattern.permute.xlu0 0
    %1080 = vperm.xlu0 %1079, %v1006
    %v1081 = vpop.permute.xlu0 %1080
    %1084 = vset.pattern.permute.xlu0 0
    %1085 = vperm.xlu0 %1084, %v1007
    %v1086 = vpop.permute.xlu0 %1085
    %v1088 = vmul.f32 %v85, %v1011
    %v1089 = vmul.f32 %v86, %v1016
    %v1090 = vmul.f32 %v87, %v1021
    %v1091 = vmul.f32 %v88, %v1026
    %v1092 = vmul.f32 %v89, %v1031
    %v1093 = vmul.f32 %v90, %v1036
    %v1094 = vmul.f32 %v91, %v1041
    %v1095 = vmul.f32 %v92, %v1046
    %v1096 = vmul.f32 %v93, %v1051
    %v1097 = vmul.f32 %v94, %v1056
    %v1098 = vmul.f32 %v95, %v1061
    %v1099 = vmul.f32 %v96, %v1066
    %v1100 = vmul.f32 %v97, %v1071
    %v1101 = vmul.f32 %v98, %v1076
    %v1102 = vmul.f32 %v99, %v1081
    %v1103 = vmul.f32 %v100, %v1086
    %v1104 = vsel %vm106, %v1088, 0.0
    %v1105 = vsel %vm106, %v1089, 0.0
    %v1106 = vadd.f32 %v1104, %v1105
    %v1107 = vrot.slane %v1106, 4
    %v1108 = vadd.f32 %v1106, %v1107
    %v1109 = vrot.slane %v1108, 2
    %v1110 = vadd.f32 %v1108, %v1109
    %v1111 = vrot.slane %v1110, 1
    %v1112 = vadd.f32 %v1110, %v1111
    %v1113 = vsel %vm106, %v1090, 0.0
    %v1114 = vsel %vm106, %v1091, 0.0
    %v1115 = vadd.f32 %v1113, %v1114
    %v1116 = vrot.slane %v1115, 4
    %v1117 = vadd.f32 %v1115, %v1116
    %v1118 = vrot.slane %v1117, 2
    %v1119 = vadd.f32 %v1117, %v1118
    %v1120 = vrot.slane %v1119, 1
    %v1121 = vadd.f32 %v1119, %v1120
    %v1122 = vsel %vm106, %v1092, 0.0
    %v1123 = vsel %vm106, %v1093, 0.0
    %v1124 = vadd.f32 %v1122, %v1123
    %v1125 = vrot.slane %v1124, 4
    %v1126 = vadd.f32 %v1124, %v1125
    %v1127 = vrot.slane %v1126, 2
    %v1128 = vadd.f32 %v1126, %v1127
    %v1129 = vrot.slane %v1128, 1
    %v1130 = vadd.f32 %v1128, %v1129
    %v1131 = vsel %vm106, %v1094, 0.0
    %v1132 = vsel %vm106, %v1095, 0.0
    %v1133 = vadd.f32 %v1131, %v1132
    %v1134 = vrot.slane %v1133, 4
    %v1135 = vadd.f32 %v1133, %v1134
    %v1136 = vrot.slane %v1135, 2
    %v1137 = vadd.f32 %v1135, %v1136
    %v1138 = vrot.slane %v1137, 1
    %v1139 = vadd.f32 %v1137, %v1138
    %v1140 = vsel %vm106, %v1096, 0.0
    %v1141 = vsel %vm106, %v1097, 0.0
    %v1142 = vadd.f32 %v1140, %v1141
    %v1143 = vrot.slane %v1142, 4
    %v1144 = vadd.f32 %v1142, %v1143
    %v1145 = vrot.slane %v1144, 2
    %v1146 = vadd.f32 %v1144, %v1145
    %v1147 = vrot.slane %v1146, 1
    %v1148 = vadd.f32 %v1146, %v1147
    %v1149 = vsel %vm106, %v1098, 0.0
    %v1150 = vsel %vm106, %v1099, 0.0
    %v1151 = vadd.f32 %v1149, %v1150
    %v1152 = vrot.slane %v1151, 4
    %v1153 = vadd.f32 %v1151, %v1152
    %v1154 = vrot.slane %v1153, 2
    %v1155 = vadd.f32 %v1153, %v1154
    %v1156 = vrot.slane %v1155, 1
    %v1157 = vadd.f32 %v1155, %v1156
    %v1158 = vsel %vm106, %v1100, 0.0
    %v1159 = vsel %vm106, %v1101, 0.0
    %v1160 = vadd.f32 %v1158, %v1159
    %v1161 = vrot.slane %v1160, 4
    %v1162 = vadd.f32 %v1160, %v1161
    %v1163 = vrot.slane %v1162, 2
    %v1164 = vadd.f32 %v1162, %v1163
    %v1165 = vrot.slane %v1164, 1
    %v1166 = vadd.f32 %v1164, %v1165
    %v1167 = vsel %vm106, %v1102, 0.0
    %v1168 = vsel %vm106, %v1103, 0.0
    %v1169 = vadd.f32 %v1167, %v1168
    %v1170 = vrot.slane %v1169, 4
    %v1171 = vadd.f32 %v1169, %v1170
    %v1172 = vrot.slane %v1171, 2
    %v1173 = vadd.f32 %v1171, %v1172
    %v1174 = vrot.slane %v1173, 1
    %v1175 = vadd.f32 %v1173, %v1174
    %v1184 = vsel %vm695, %v1121, %v1112
    %v1185 = vsel %vm697, %v1130, %v1184
    %v1186 = vsel %vm699, %v1139, %v1185
    %v1187 = vsel %vm701, %v1148, %v1186
    %v1188 = vsel %vm703, %v1157, %v1187
    %v1189 = vsel %vm705, %v1166, %v1188
    %v1190 = vsel %vm707, %v1175, %v1189
    %1192 = vst.msk [vmem:[#allocation11] sm:$0xff] %vm106, %v1190
    %v1193 = vlaneseq
    %v1194 = vshrl.u32 %v1193, 7
    %v1195 = vsub.s32 %v620, %v1194
    %v1196 = vrot.slane %v1011, %v1195
    %v1197 = vlaneseq
    %v1198 = vshrl.u32 %v1197, 7
    %v1199 = vsub.s32 %v625, %v1198
    %v1200 = vrot.slane %v1016, %v1199
    %v1201 = vsel %vm630, %v1200, %v1196
    %v1202 = vlaneseq
    %v1203 = vshrl.u32 %v1202, 7
    %v1204 = vsub.s32 %v620, %v1203
    %v1205 = vrot.slane %v1021, %v1204
    %v1206 = vlaneseq
    %v1207 = vshrl.u32 %v1206, 7
    %v1208 = vsub.s32 %v625, %v1207
    %v1209 = vrot.slane %v1026, %v1208
    %v1210 = vsel %vm630, %v1209, %v1205
    %v1211 = vlaneseq
    %v1212 = vshrl.u32 %v1211, 7
    %v1213 = vsub.s32 %v620, %v1212
    %v1214 = vrot.slane %v1031, %v1213
    %v1215 = vlaneseq
    %v1216 = vshrl.u32 %v1215, 7
    %v1217 = vsub.s32 %v625, %v1216
    %v1218 = vrot.slane %v1036, %v1217
    %v1219 = vsel %vm630, %v1218, %v1214
    %v1220 = vlaneseq
    %v1221 = vshrl.u32 %v1220, 7
    %v1222 = vsub.s32 %v620, %v1221
    %v1223 = vrot.slane %v1041, %v1222
    %v1224 = vlaneseq
    %v1225 = vshrl.u32 %v1224, 7
    %v1226 = vsub.s32 %v625, %v1225
    %v1227 = vrot.slane %v1046, %v1226
    %v1228 = vsel %vm630, %v1227, %v1223
    %v1229 = vlaneseq
    %v1230 = vshrl.u32 %v1229, 7
    %v1231 = vsub.s32 %v620, %v1230
    %v1232 = vrot.slane %v1051, %v1231
    %v1233 = vlaneseq
    %v1234 = vshrl.u32 %v1233, 7
    %v1235 = vsub.s32 %v625, %v1234
    %v1236 = vrot.slane %v1056, %v1235
    %v1237 = vsel %vm630, %v1236, %v1232
    %v1238 = vlaneseq
    %v1239 = vshrl.u32 %v1238, 7
    %v1240 = vsub.s32 %v620, %v1239
    %v1241 = vrot.slane %v1061, %v1240
    %v1242 = vlaneseq
    %v1243 = vshrl.u32 %v1242, 7
    %v1244 = vsub.s32 %v625, %v1243
    %v1245 = vrot.slane %v1066, %v1244
    %v1246 = vsel %vm630, %v1245, %v1241
    %v1247 = vlaneseq
    %v1248 = vshrl.u32 %v1247, 7
    %v1249 = vsub.s32 %v620, %v1248
    %v1250 = vrot.slane %v1071, %v1249
    %v1251 = vlaneseq
    %v1252 = vshrl.u32 %v1251, 7
    %v1253 = vsub.s32 %v625, %v1252
    %v1254 = vrot.slane %v1076, %v1253
    %v1255 = vsel %vm630, %v1254, %v1250
    %v1256 = vlaneseq
    %v1257 = vshrl.u32 %v1256, 7
    %v1258 = vsub.s32 %v620, %v1257
    %v1259 = vrot.slane %v1081, %v1258
    %v1260 = vlaneseq
    %v1261 = vshrl.u32 %v1260, 7
    %v1262 = vsub.s32 %v625, %v1261
    %v1263 = vrot.slane %v1086, %v1262
    %v1264 = vsel %vm630, %v1263, %v1259
    %v1265 = vsel %vm695, %v1210, %v1201
    %v1266 = vsel %vm697, %v1219, %v1265
    %v1267 = vsel %vm699, %v1228, %v1266
    %v1268 = vsel %vm701, %v1237, %v1267
    %v1269 = vsel %vm703, %v1246, %v1268
    %v1270 = vsel %vm705, %v1255, %v1269
    %v1271 = vsel %vm707, %v1264, %v1270
    %1273 = vst.msk [vmem:[#allocation12] sm:$0xff] %vm710, %v1271
    // Predicated region
    $region46: #{tpu_custom_call.1} parent=1 // pred_check
      _
    $region47: #{tpu_custom_call.1} parent=1 // pred_check_branch
      %1275 = sbr.rel (0) target = $region49
    $region48: #{tpu_custom_call.1} parent=1 // pred_region
      %s1277 = ssub.s32 128, 128
      %1278 = vsyncadd [#allocation5], %s1277
      %s1280 = sshll.u32 [#allocation11], 4
      %s1281 = int_to_ptr.vmem [resolvable:$true] %s1280
      %1283 = dma.vmem_to_hbm [thread:$0]  %s1281, 128, %s7, [#allocation5]
    $region49: #{tpu_custom_call.1} parent=1 // pred_fallthru
      _
    // Predicated region
    $region50: #{tpu_custom_call.1} parent=1 // pred_check
      _
    $region51: #{tpu_custom_call.1} parent=1 // pred_check_branch
      %1285 = sbr.rel (0) target = $region53
    $region52: #{tpu_custom_call.1} parent=1 // pred_region
      %s1287 = ssub.s32 128, 128
      %1288 = vsyncadd [#allocation13], %s1287
      %s1290 = sshll.u32 [#allocation12], 4
      %s1291 = int_to_ptr.vmem [resolvable:$true] %s1290
      %1293 = dma.vmem_to_hbm [thread:$0]  %s1291, 128, %s8, [#allocation13]
    $region53: #{tpu_custom_call.1} parent=1 // pred_fallthru
      _
    // Predicated region
    $region54: #{tpu_custom_call.1} parent=1 // pred_check
      _
    $region55: #{tpu_custom_call.1} parent=1 // pred_check_branch
      %1295 = sbr.rel (0) target = $region57
    $region56: #{tpu_custom_call.1} parent=1 // pred_region
      %1296 = dma.done [#allocation5], 128
    $region57: #{tpu_custom_call.1} parent=1 // pred_fallthru
      _
    // Predicated region
    $region58: #{tpu_custom_call.1} parent=1 // pred_check
      _
    $region59: #{tpu_custom_call.1} parent=1 // pred_check_branch
      %1298 = sbr.rel (0) target = $region61
    $region60: #{tpu_custom_call.1} parent=1 // pred_region
      %1299 = dma.done [#allocation13], 128
    $region61: #{tpu_custom_call.1} parent=1 // pred_fallthru
      _
    %1300 = vsyncpa [#allocation4], 1
    %1301 = vsyncpa [#allocation7], 1
    %1302 = vsyncpa [#allocation10], 1
    %1303 = vsyncpa [#allocation5], 1
    %1304 = vsyncpa [#allocation13], 1

</llo_original>
